<compile_context>
chip_gen: v7x
topology: tpu7x:2x2x1
jax: 0.10.0
libtpu: 0.0.40
codegen_flags: <defaults>
</compile_context>

<pallas_src>
import functools

import jax
import jax.numpy as jnp
from jax import lax
from jax.experimental import pallas as pl
from jax.experimental.pallas import tpu as pltpu


HIDDEN = 128          # hard-coded by nn.Conv2d(3C, 128, 1) in the PyTorch module
ALPHA = 3             # alpha channel index used by live_cell_mask
ALPHA_THRESHOLD = 0.1
_MM_MAX_LANES = 8192  # keeps the (128, chunk) f32 hidden activation <= 4 MiB


@functools.lru_cache(maxsize=1)
def _vmem_capacity_bytes():
    try:
        info = pltpu.get_tpu_info()
        cap = getattr(info, "vmem_capacity_bytes", None)
        if cap:
            return int(cap)
    except Exception:
        pass
    return 64 << 20            # conservative (v7x-sized) fallback


def _pick_batch_tile(B, C, HW):
    """Largest divisor of B that fits the per-step working set.

    v5e/v6e (128 MiB VMEM, single TC): big tiles, no core split.
    v7x-ish (64 MiB VMEM, 2 TCs): smaller budget and keep >= 2 grid steps so the
    'parallel' batch axis can be sharded across both TensorCores.
    """
    cap_bytes = _vmem_capacity_bytes()
    if cap_bytes >= (100 << 20):
        max_tile, budget, split_for_cores = 16, 24 << 20, False
    else:
        max_tile, budget, split_for_cores = 8, 8 << 20, True
    per_image = 4 * HW * (8 * C + 3 * C) + HW * HIDDEN // 2   # rough f32 bytes
    cap = max(1, min(max_tile, budget // max(per_image, 1)))
    if split_for_cores and B >= 2:
        cap = min(cap, max(1, B // 2))
    bt = 1
    for d in range(1, min(B, cap) + 1):
        if B % d == 0:
            bt = d
    return bt


def _pick_mm_plan(bt, HW):
    """Returns (fuse_all, n_sub).

    fuse_all: one matmul pair over all bt*HW lanes (best MXU fill).
    Otherwise per-image matmuls; n_sub > 1 further lane-chunks each image so the
    (128, chunk) f32 hidden never blows the VMEM budget (v7x-sized images).
    """
    if bt * HW <= _MM_MAX_LANES:
        return True, 1
    if HW <= _MM_MAX_LANES:
        return False, 1
    best_any = None
    for d in range(2, 4097):
        if HW % d == 0 and HW // d <= _MM_MAX_LANES:
            if (HW // d) % 128 == 0:
                return False, d
            if best_any is None:
                best_any = d
    return False, (best_any or 1)


def _cann_kernel(x_ref, keep_ref, w1_ref, b1_ref, w2_ref, out_ref,
                 perc_ref, dx_ref, *, H, W, C, bt, n_sub, fuse_all, mm_dtype):
    # x_ref    : (bt*C, HW) f32      input images, channel-major, lane-dense
    # keep_ref : (bt, 1, HW) bf16    stochastic-survival mask (0/1)
    # w1_ref   : (128, 3C) mm_dtype  first 1x1 conv, cols [all-id|all-sx|all-sy]
    # b1_ref   : (128, 1)  f32
    # w2_ref   : (C, 128)  mm_dtype  second 1x1 conv (zeroed in torch __init__)
    # out_ref  : (bt*C, HW) f32
    # perc_ref : (3C, bt*HW) mm_dtype  VMEM scratch: packed perceived vector
    # dx_ref   : (C, HW) f32           VMEM scratch: per-image dx when n_sub > 1
    HW = H * W
    f32 = jnp.float32

    # Per-lane neighbour-validity masks (zero padding folded in), shape (1, HW).
    p = lax.broadcasted_iota(jnp.int32, (1, HW), 1)
    j = p % W
    m_up = (p >= W).astype(f32)              # a neighbour one row above exists
    m_dn = (p < (H - 1) * W).astype(f32)     # a neighbour one row below exists
    m_lf = (j >= 1).astype(f32)              # left neighbour exists
    m_rt = (j <= W - 2).astype(f32)          # right neighbour exists

    def shift(z, off):
        # y[..., p] = z[..., (p + off) % HW]  (XLU lane rotate).  Wrapped lanes
        # are exactly the masked boundary lanes, so callers multiply by m_*.
        amt = (-off) % HW
        if amt == 0:
            return z
        return pltpu.roll(z, amt, z.ndim - 1)

    def pool0(a):
        # Separable 3x3 max with 0-padding.  Only valid because the result just
        # feeds "> ALPHA_THRESHOLD (= 0.1 > 0)", which is boolean-equal to the
        # -inf-padded max_pool2d of the reference.
        vm = jnp.maximum(jnp.maximum(shift(a, -W) * m_up, shift(a, W) * m_dn), a)
        return jnp.maximum(jnp.maximum(shift(vm, -1) * m_lf, shift(vm, 1) * m_rt), vm)

    # ---- 1. perception: separable depthwise 3x3 (identity / sobel_x / sobel_y)
    #         vectorized over all bt images at once --------------------------
    x_all = x_ref[...]                                     # (bt*C, HW) f32
    up = shift(x_all, -W) * m_up                           # x[row-1, col]
    dn = shift(x_all, W) * m_dn                            # x[row+1, col]
    vs = up + 2.0 * x_all + dn                             # vertical [1, 2, 1]
    vd = dn - up                                           # vertical [-1, 0, 1]
    p_sx = (shift(vs, 1) * m_rt - shift(vs, -1) * m_lf) * 0.125
    p_sy = (shift(vd, -1) * m_lf + 2.0 * vd + shift(vd, 1) * m_rt) * 0.125

    # pack into the (3C, bt*HW) perceived scratch (lane-slice per image)
    for b in range(bt):
        img = slice(b * HW, (b + 1) * HW)
        chan = slice(b * C, (b + 1) * C)
        perc_ref[0:C, img] = x_all[chan, :].astype(mm_dtype)
        perc_ref[C:2 * C, img] = p_sx[chan, :].astype(mm_dtype)
        perc_ref[2 * C:3 * C, img] = p_sy[chan, :].astype(mm_dtype)

    # ---- 2. both 1x1 convs as weight-stationary channel-major matmuls ------
    w1 = w1_ref[...]
    b1 = b1_ref[...]
    w2 = w2_ref[...]

    def mm_pair(perc_block):                               # (3C, N) -> (C, N) f32
        h = jnp.dot(w1, perc_block, preferred_element_type=f32) + b1
        h = jnp.maximum(h, 0.0)
        return jnp.dot(w2, h.astype(mm_dtype), preferred_element_type=f32)

    dx_full = mm_pair(perc_ref[...]) if fuse_all else None  # (C, bt*HW) f32

    # ---- 3..5 stochastic update, live-cell mask, lane-dense store ----------
    for b in range(bt):
        chan = slice(b * C, (b + 1) * C)
        if fuse_all:
            dx_b = dx_full if bt == 1 else dx_full[:, b * HW:(b + 1) * HW]
        elif n_sub == 1:
            dx_b = mm_pair(perc_ref[:, b * HW:(b + 1) * HW])
        else:  # lane-sub-chunked matmul bounds the (128, N) f32 hidden on v7x
            sub = HW // n_sub
            for s in range(n_sub):
                lo = b * HW + s * sub
                dx_ref[:, s * sub:(s + 1) * sub] = mm_pair(perc_ref[:, lo:lo + sub])
            dx_b = dx_ref[...]

        x_b = x_ref[chan, :]                               # (C, HW) f32
        keep_b = keep_ref[b].astype(f32)                   # (1, HW), bcast over C
        x_new = x_b + dx_b * keep_b
        pre = pool0(x_b[ALPHA:ALPHA + 1, :])
        post = pool0(x_new[ALPHA:ALPHA + 1, :])
        live = ((pre > ALPHA_THRESHOLD) & (post > ALPHA_THRESHOLD)).astype(f32)
        out_ref[chan, :] = x_new * live


@functools.partial(jax.jit, static_argnames=("matmul_dtype",))
def cann_forward(x_nchw, w1, b1, w2, keep_nchw, matmul_dtype=jnp.bfloat16):
    """CANN.forward.

    x_nchw    : (B, C, H, W) float32   (C must be 16, as in the torch module)
    w1        : (128, 3*C)   Conv2d(3C,128,1).weight squeezed
    b1        : (128,)       Conv2d(3C,128,1).bias
    w2        : (C, 128)     Conv2d(128,C,1,bias=False).weight squeezed
    keep_nchw : (B, 1, H, W) precomputed stochastic survival mask (0/1 float)
    matmul_dtype: jnp.bfloat16 (MXU-native, f32 accumulation) or jnp.float32
    """
    B, C, H, W = x_nchw.shape
    HW = H * W
    mm_dtype = jnp.dtype(matmul_dtype)
    mm_bytes = mm_dtype.itemsize

    # NCHW end-to-end: only contiguity-preserving (free) reshapes.
    x = x_nchw.reshape(B * C, HW).astype(jnp.float32)
    keep = keep_nchw.reshape(B, 1, HW).astype(jnp.bfloat16)   # 0/1 exact in bf16

    # De-interleave W1 columns: torch perceived order per pixel is
    # [c0_id, c0_sx, c0_sy, c1_id, ...]; the kernel feeds [all-id|all-sx|all-sy].
    w1_r = w1.reshape(HIDDEN, C, 3)
    w1_k = jnp.concatenate([w1_r[:, :, 0], w1_r[:, :, 1], w1_r[:, :, 2]],
                           axis=1).astype(mm_dtype)           # (128, 3C)
    b1_k = b1.reshape(HIDDEN, 1).astype(jnp.float32)
    w2_k = w2.reshape(C, HIDDEN).astype(mm_dtype)             # (C, 128)

    bt = _pick_batch_tile(B, C, HW)
    fuse_all, n_sub = _pick_mm_plan(bt, HW)
    grid = (B // bt,)

    # generation-aware scoped-VMEM budget (no hard 32 MiB clamp)
    n_mm_lanes = bt * HW if fuse_all else max(HW // n_sub, 1)
    vmem_cap = _vmem_capacity_bytes()
    est = ((HIDDEN * 3 * C + C * HIDDEN) * mm_bytes + HIDDEN * 4          # weights
           + 2 * bt * (C * HW * 4 + HW * 2 + C * HW * 4)                  # dbl-buffered x/keep/out
           + 3 * C * bt * HW * mm_bytes + C * HW * 4                      # scratches
           + 8 * bt * C * HW * 4                                          # perception live values
           + (HIDDEN + C) * n_mm_lanes * 4 + C * bt * HW * 4              # h chunk + dx
           + (2 << 20))
    vmem_limit = min(max(est, 16 << 20), int(vmem_cap * 0.9))

    kernel = functools.partial(_cann_kernel, H=H, W=W, C=C, bt=bt,
                               n_sub=n_sub, fuse_all=fuse_all, mm_dtype=mm_dtype)

    out = pl.pallas_call(
        kernel,
        out_shape=jax.ShapeDtypeStruct((B * C, HW), jnp.float32),
        grid_spec=pltpu.PrefetchScalarGridSpec(
            num_scalar_prefetch=0,
            grid=grid,
            in_specs=[
                pl.BlockSpec((bt * C, HW), lambda i: (i, 0)),
                pl.BlockSpec((bt, 1, HW), lambda i: (i, 0, 0)),
                pl.BlockSpec((HIDDEN, 3 * C), lambda i: (0, 0)),
                pl.BlockSpec((HIDDEN, 1), lambda i: (0, 0)),
                pl.BlockSpec((C, HIDDEN), lambda i: (0, 0)),
            ],
            out_specs=pl.BlockSpec((bt * C, HW), lambda i: (i, 0)),
            scratch_shapes=[
                pltpu.VMEM((3 * C, bt * HW), mm_dtype),   # perceived vector
                pltpu.VMEM((C, HW), jnp.float32),         # per-image dx (chunked path)
            ],
        ),
        compiler_params=pltpu.CompilerParams(
            # TODO(synk): if a spatial row-tile grid axis is ever added for very
            # large images, mark it "parallel" too so both v7x TCs stay busy at
            # B == bt.
            dimension_semantics=("parallel",),
            vmem_limit_bytes=int(vmem_limit),
        ),
    )(x, keep, w1_k, b1_k, w2_k)

    return out.reshape(B, C, H, W)


@jax.jit
def cann_reference(x, w1, b1, w2, keep):
    """Pure-JAX reference of CANN.forward (self-check only)."""
    B, C, H, W = x.shape
    xp = jnp.pad(x, ((0, 0), (0, 0), (1, 1), (1, 1)))
    sh = lambda a, b: xp[:, :, a:a + H, b:b + W]
    p_id = x
    p_sx = (-sh(0, 0) + sh(0, 2) - 2 * sh(1, 0) + 2 * sh(1, 2) - sh(2, 0) + sh(2, 2)) / 8.0
    p_sy = (-sh(0, 0) - 2 * sh(0, 1) - sh(0, 2) + sh(2, 0) + 2 * sh(2, 1) + sh(2, 2)) / 8.0
    perceived = jnp.stack([p_id, p_sx, p_sy], axis=2).reshape(B, 3 * C, H, W)
    h = jnp.einsum("ok,bkhw->bohw", w1, perceived) + b1[None, :, None, None]
    h = jnp.maximum(h, 0.0)
    dx = jnp.einsum("ck,bkhw->bchw", w2, h) * keep
    x_new = x + dx

    def pool(a):
        ap = jnp.pad(a, ((0, 0), (0, 0), (1, 1), (1, 1)), constant_values=-jnp.inf)
        m = jnp.full_like(a, -jnp.inf)
        for di in range(3):
            for dj in range(3):
                m = jnp.maximum(m, ap[:, :, di:di + H, dj:dj + W])
        return m

    live = ((pool(x[:, ALPHA:ALPHA + 1]) > ALPHA_THRESHOLD)
            & (pool(x_new[:, ALPHA:ALPHA + 1]) > ALPHA_THRESHOLD)).astype(jnp.float32)
    return x_new * live


if __name__ == "__main__":
    # n_channels must be 16 (the torch module hard-codes filters.repeat((16,1,1)))
    B, C, H, W = 2, 16, 16, 16
    cell_survival_rate = 0.5

    key = jax.random.PRNGKey(0)
    kx, kw1, kb1, kw2, kmask = jax.random.split(key, 5)

    x = jax.random.uniform(kx, (B, C, H, W), jnp.float32)
    # keep the alpha channel well above the 0.1 live threshold so the
    # discontinuous live-mask cannot flip on float noise in the self-check
    x = x.at[:, ALPHA].set(0.3 + 0.7 * x[:, ALPHA])

    w1 = jax.random.normal(kw1, (HIDDEN, 3 * C), jnp.float32) * 0.1   # Conv2d(48,128,1).weight
    b1 = jax.random.normal(kb1, (HIDDEN,), jnp.float32) * 0.1         # Conv2d(48,128,1).bias
    w2_zero = jnp.zeros((C, HIDDEN), jnp.float32)                     # weight.zero_() per __init__
    w2_rand = jax.random.normal(kw2, (C, HIDDEN), jnp.float32) * 1e-3 # exercise the matmul path

    # TODO(synk): torch RNG stream is not bit-reproducible in JAX; semantics
    # (Bernoulli(cell_survival_rate) mask of shape (B,1,H,W)) match.
    keep = (jax.random.uniform(kmask, (B, 1, H, W)) <= cell_survival_rate).astype(jnp.float32)

    # exact f32 MXU path vs pure-JAX reference
    out = cann_forward(x, w1, b1, w2_zero, keep, matmul_dtype=jnp.float32)
    jax.block_until_ready(out)
    assert out.shape == (B, C, H, W) and out.dtype == jnp.float32
    ref = cann_reference(x, w1, b1, w2_zero, keep)
    assert bool(jnp.allclose(out, ref, atol=1e-5, rtol=1e-5)), \
        f"mismatch (zero w2, f32): {float(jnp.max(jnp.abs(out - ref)))}"

    ref2 = cann_reference(x, w1, b1, w2_rand, keep)
    out2 = cann_forward(x, w1, b1, w2_rand, keep, matmul_dtype=jnp.float32)
    assert bool(jnp.allclose(out2, ref2, atol=1e-4, rtol=1e-4)), \
        f"mismatch (rand w2, f32): {float(jnp.max(jnp.abs(out2 - ref2)))}"

    # default bf16 MXU path (f32 accumulation)
    out3 = cann_forward(x, w1, b1, w2_rand, keep)
    jax.block_until_ready(out3)
    assert bool(jnp.allclose(out3, ref2, atol=5e-3, rtol=5e-3)), \
        f"mismatch (rand w2, bf16): {float(jnp.max(jnp.abs(out3 - ref2)))}"

    print("KERNEL_OK")
</pallas_src>

<mosaic_0001>
module attributes {stable_mosaic.version = 11 : i64} {
  func.func @_cann_kernel(%arg0: i32, %arg1: memref<16x256xf32, #tpu.memory_space<vmem>>, %arg2: memref<1x1x256xbf16, #tpu.memory_space<vmem>>, %arg3: memref<128x48xf32, #tpu.memory_space<vmem>>, %arg4: memref<128x1xf32, #tpu.memory_space<vmem>>, %arg5: memref<16x128xf32, #tpu.memory_space<vmem>>, %arg6: memref<16x256xf32, #tpu.memory_space<vmem>>, %arg7: memref<48x256xf32, #tpu.memory_space<vmem>>, %arg8: memref<16x256xf32, #tpu.memory_space<vmem>>) attributes {dimension_semantics = [#tpu.dimension_semantics<parallel>], iteration_bounds = array<i64: 2>, scalar_prefetch = 0 : i64, scratch_operands = 2 : i64, tpu.core_type = #tpu.core_type<tc>, window_params = [{transform_indices = @transform_0, window_bounds = array<i64: 16, 256>}, {transform_indices = @transform_1, window_bounds = array<i64: 1, 1, 256>}, {pipeline_mode = #tpu.pipeline_mode<synchronous>, transform_indices = @transform_2, window_bounds = array<i64: 128, 48>}, {pipeline_mode = #tpu.pipeline_mode<synchronous>, transform_indices = @transform_3, window_bounds = array<i64: 128, 1>}, {pipeline_mode = #tpu.pipeline_mode<synchronous>, transform_indices = @transform_4, window_bounds = array<i64: 16, 128>}, {transform_indices = @transform_5, window_bounds = array<i64: 16, 256>}]} {
    %0 = tpu.iota {dimensions = array<i32: 1>} : vector<1x256xi32>
    %c16_i32 = arith.constant 16 : i32
    %c0_i32 = arith.constant 0 : i32
    %1 = arith.cmpi eq, %c16_i32, %c0_i32 : i32
    %c1_i32 = arith.constant 1 : i32
    %2 = arith.select %1, %c1_i32, %c16_i32 : i32
    %3 = vector.broadcast %2 : i32 to vector<1x256xi32>
    %4 = arith.remsi %0, %3 : vector<1x256xi32>
    %c0_i32_0 = arith.constant 0 : i32
    %5 = vector.broadcast %c0_i32_0 : i32 to vector<1x256xi32>
    %6 = arith.cmpi ne, %4, %5 : vector<1x256xi32>
    %c0_i32_1 = arith.constant 0 : i32
    %7 = vector.broadcast %c0_i32_1 : i32 to vector<1x256xi32>
    %8 = arith.cmpi slt, %4, %7 : vector<1x256xi32>
    %c0_i32_2 = arith.constant 0 : i32
    %9 = arith.cmpi slt, %2, %c0_i32_2 : i32
    %10 = vector.broadcast %9 : i1 to vector<1x256xi1>
    %11 = vector.broadcast %10 : vector<1x256xi1> to vector<1x256xi1>
    %12 = arith.xori %8, %11 : vector<1x256xi1>
    %13 = arith.andi %12, %6 : vector<1x256xi1>
    %14 = vector.broadcast %2 : i32 to vector<1x256xi32>
    %15 = arith.addi %4, %14 : vector<1x256xi32>
    %16 = arith.select %13, %15, %4 : vector<1x256xi1>, vector<1x256xi32>
    %c16_i32_3 = arith.constant 16 : i32
    %17 = vector.broadcast %c16_i32_3 : i32 to vector<1x256xi32>
    %18 = arith.cmpi sge, %0, %17 : vector<1x256xi32>
    %19 = arith.extui %18 : vector<1x256xi1> to vector<1x256xi32>
    %20 = arith.sitofp %19 : vector<1x256xi32> to vector<1x256xf32>
    %c240_i32 = arith.constant 240 : i32
    %21 = vector.broadcast %c240_i32 : i32 to vector<1x256xi32>
    %22 = arith.cmpi slt, %0, %21 : vector<1x256xi32>
    %23 = arith.extui %22 : vector<1x256xi1> to vector<1x256xi32>
    %24 = arith.sitofp %23 : vector<1x256xi32> to vector<1x256xf32>
    %c1_i32_4 = arith.constant 1 : i32
    %25 = vector.broadcast %c1_i32_4 : i32 to vector<1x256xi32>
    %26 = arith.cmpi sge, %16, %25 : vector<1x256xi32>
    %27 = arith.extui %26 : vector<1x256xi1> to vector<1x256xi32>
    %28 = arith.sitofp %27 : vector<1x256xi32> to vector<1x256xf32>
    %c14_i32 = arith.constant 14 : i32
    %29 = vector.broadcast %c14_i32 : i32 to vector<1x256xi32>
    %30 = arith.cmpi sle, %16, %29 : vector<1x256xi32>
    %31 = arith.extui %30 : vector<1x256xi1> to vector<1x256xi32>
    %32 = arith.sitofp %31 : vector<1x256xi32> to vector<1x256xf32>
    %c0 = arith.constant 0 : index
    %c0_5 = arith.constant 0 : index
    %33 = vector.load %arg1[%c0, %c0_5] : memref<16x256xf32, #tpu.memory_space<vmem>>, vector<16x256xf32>
    %c16_i32_6 = arith.constant 16 : i32
    %34 = tpu.dynamic_rotate %33 by %c16_i32_6 dim 1 : vector<16x256xf32>, i32 -> vector<16x256xf32>
    %35 = vector.broadcast %20 : vector<1x256xf32> to vector<16x256xf32>
    %36 = arith.mulf %34, %35 : vector<16x256xf32>
    %c240_i32_7 = arith.constant 240 : i32
    %37 = tpu.dynamic_rotate %33 by %c240_i32_7 dim 1 : vector<16x256xf32>, i32 -> vector<16x256xf32>
    %38 = vector.broadcast %24 : vector<1x256xf32> to vector<16x256xf32>
    %39 = arith.mulf %37, %38 : vector<16x256xf32>
    %cst = arith.constant 2.000000e+00 : f32
    %40 = vector.broadcast %cst : f32 to vector<16x256xf32>
    %41 = arith.mulf %40, %33 : vector<16x256xf32>
    %42 = arith.addf %36, %41 : vector<16x256xf32>
    %43 = arith.addf %42, %39 : vector<16x256xf32>
    %44 = arith.subf %39, %36 : vector<16x256xf32>
    %c255_i32 = arith.constant 255 : i32
    %45 = tpu.dynamic_rotate %43 by %c255_i32 dim 1 : vector<16x256xf32>, i32 -> vector<16x256xf32>
    %46 = vector.broadcast %32 : vector<1x256xf32> to vector<16x256xf32>
    %47 = arith.mulf %45, %46 : vector<16x256xf32>
    %c1_i32_8 = arith.constant 1 : i32
    %48 = tpu.dynamic_rotate %43 by %c1_i32_8 dim 1 : vector<16x256xf32>, i32 -> vector<16x256xf32>
    %49 = vector.broadcast %28 : vector<1x256xf32> to vector<16x256xf32>
    %50 = arith.mulf %48, %49 : vector<16x256xf32>
    %51 = arith.subf %47, %50 : vector<16x256xf32>
    %cst_9 = arith.constant 1.250000e-01 : f32
    %52 = vector.broadcast %cst_9 : f32 to vector<16x256xf32>
    %53 = arith.mulf %51, %52 : vector<16x256xf32>
    %c1_i32_10 = arith.constant 1 : i32
    %54 = tpu.dynamic_rotate %44 by %c1_i32_10 dim 1 : vector<16x256xf32>, i32 -> vector<16x256xf32>
    %55 = vector.broadcast %28 : vector<1x256xf32> to vector<16x256xf32>
    %56 = arith.mulf %54, %55 : vector<16x256xf32>
    %cst_11 = arith.constant 2.000000e+00 : f32
    %57 = vector.broadcast %cst_11 : f32 to vector<16x256xf32>
    %58 = arith.mulf %57, %44 : vector<16x256xf32>
    %59 = arith.addf %56, %58 : vector<16x256xf32>
    %c255_i32_12 = arith.constant 255 : i32
    %60 = tpu.dynamic_rotate %44 by %c255_i32_12 dim 1 : vector<16x256xf32>, i32 -> vector<16x256xf32>
    %61 = vector.broadcast %32 : vector<1x256xf32> to vector<16x256xf32>
    %62 = arith.mulf %60, %61 : vector<16x256xf32>
    %63 = arith.addf %59, %62 : vector<16x256xf32>
    %cst_13 = arith.constant 1.250000e-01 : f32
    %64 = vector.broadcast %cst_13 : f32 to vector<16x256xf32>
    %65 = arith.mulf %63, %64 : vector<16x256xf32>
    %c0_14 = arith.constant 0 : index
    %c0_15 = arith.constant 0 : index
    %66 = vector.load %arg7[%c0_14, %c0_15] : memref<48x256xf32, #tpu.memory_space<vmem>>, vector<16x256xf32>
    tpu.vector_store %arg7[%c0_14, %c0_15], %33 {strides = array<i32>} : memref<48x256xf32, #tpu.memory_space<vmem>>, vector<16x256xf32>,
    %c16 = arith.constant 16 : index
    %c0_16 = arith.constant 0 : index
    %67 = vector.load %arg7[%c16, %c0_16] : memref<48x256xf32, #tpu.memory_space<vmem>>, vector<16x256xf32>
    tpu.vector_store %arg7[%c16, %c0_16], %53 {strides = array<i32>} : memref<48x256xf32, #tpu.memory_space<vmem>>, vector<16x256xf32>,
    %c32 = arith.constant 32 : index
    %c0_17 = arith.constant 0 : index
    %68 = vector.load %arg7[%c32, %c0_17] : memref<48x256xf32, #tpu.memory_space<vmem>>, vector<16x256xf32>
    tpu.vector_store %arg7[%c32, %c0_17], %65 {strides = array<i32>} : memref<48x256xf32, #tpu.memory_space<vmem>>, vector<16x256xf32>,
    %c0_18 = arith.constant 0 : index
    %c0_19 = arith.constant 0 : index
    %69 = vector.load %arg3[%c0_18, %c0_19] : memref<128x48xf32, #tpu.memory_space<vmem>>, vector<128x48xf32>
    %c0_20 = arith.constant 0 : index
    %c0_21 = arith.constant 0 : index
    %70 = vector.load %arg4[%c0_20, %c0_21] : memref<128x1xf32, #tpu.memory_space<vmem>>, vector<128x1xf32>
    %c0_22 = arith.constant 0 : index
    %c0_23 = arith.constant 0 : index
    %71 = vector.load %arg5[%c0_22, %c0_23] : memref<16x128xf32, #tpu.memory_space<vmem>>, vector<16x128xf32>
    %c0_24 = arith.constant 0 : index
    %c0_25 = arith.constant 0 : index
    %72 = vector.load %arg7[%c0_24, %c0_25] : memref<48x256xf32, #tpu.memory_space<vmem>>, vector<48x256xf32>
    %cst_26 = arith.constant dense<0.000000e+00> : vector<128x256xf32>
    %73 = tpu.matmul %69, %72, %cst_26 {dimension_numbers = #tpu.dot_dimension_numbers<[1], [0], [0], [1], [0, 0, 1, 1], [], []>} : vector<128x48xf32>, vector<48x256xf32>, vector<128x256xf32> -> vector<128x256xf32>
    %74 = vector.broadcast %70 : vector<128x1xf32> to vector<128x256xf32>
    %75 = arith.addf %73, %74 : vector<128x256xf32>
    %cst_27 = arith.constant 0.000000e+00 : f32
    %76 = vector.broadcast %cst_27 : f32 to vector<128x256xf32>
    %77 = arith.maximumf %75, %76 : vector<128x256xf32>
    %cst_28 = arith.constant dense<0.000000e+00> : vector<16x256xf32>
    %78 = tpu.matmul %71, %77, %cst_28 {dimension_numbers = #tpu.dot_dimension_numbers<[1], [0], [0], [1], [0, 0, 1, 1], [], []>} : vector<16x128xf32>, vector<128x256xf32>, vector<16x256xf32> -> vector<16x256xf32>
    %c0_29 = arith.constant 0 : index
    %c0_30 = arith.constant 0 : index
    %79 = vector.load %arg1[%c0_29, %c0_30] : memref<16x256xf32, #tpu.memory_space<vmem>>, vector<16x256xf32>
    %c0_31 = arith.constant 0 : index
    %c0_32 = arith.constant 0 : index
    %c0_33 = arith.constant 0 : index
    %80 = vector.load %arg2[%c0_31, %c0_32, %c0_33] : memref<1x1x256xbf16, #tpu.memory_space<vmem>>, vector<1x1x256xbf16>
    %81 = vector.shape_cast %80 : vector<1x1x256xbf16> to vector<1x256xbf16>
    %82 = arith.extf %81 : vector<1x256xbf16> to vector<1x256xf32>
    %83 = vector.broadcast %82 : vector<1x256xf32> to vector<16x256xf32>
    %84 = arith.mulf %78, %83 : vector<16x256xf32>
    %85 = arith.addf %79, %84 : vector<16x256xf32>
    %86 = vector.extract_strided_slice %79 {offsets = [3, 0], sizes = [1, 256], strides = [1, 1]} : vector<16x256xf32> to vector<1x256xf32>
    %c16_i32_34 = arith.constant 16 : i32
    %87 = tpu.dynamic_rotate %86 by %c16_i32_34 dim 1 : vector<1x256xf32>, i32 -> vector<1x256xf32>
    %88 = arith.mulf %87, %20 : vector<1x256xf32>
    %c240_i32_35 = arith.constant 240 : i32
    %89 = tpu.dynamic_rotate %86 by %c240_i32_35 dim 1 : vector<1x256xf32>, i32 -> vector<1x256xf32>
    %90 = arith.mulf %89, %24 : vector<1x256xf32>
    %91 = arith.maximumf %88, %90 : vector<1x256xf32>
    %92 = arith.maximumf %91, %86 : vector<1x256xf32>
    %c1_i32_36 = arith.constant 1 : i32
    %93 = tpu.dynamic_rotate %92 by %c1_i32_36 dim 1 : vector<1x256xf32>, i32 -> vector<1x256xf32>
    %94 = arith.mulf %93, %28 : vector<1x256xf32>
    %c255_i32_37 = arith.constant 255 : i32
    %95 = tpu.dynamic_rotate %92 by %c255_i32_37 dim 1 : vector<1x256xf32>, i32 -> vector<1x256xf32>
    %96 = arith.mulf %95, %32 : vector<1x256xf32>
    %97 = arith.maximumf %94, %96 : vector<1x256xf32>
    %98 = arith.maximumf %97, %92 : vector<1x256xf32>
    %99 = vector.extract_strided_slice %85 {offsets = [3, 0], sizes = [1, 256], strides = [1, 1]} : vector<16x256xf32> to vector<1x256xf32>
    %c16_i32_38 = arith.constant 16 : i32
    %100 = tpu.dynamic_rotate %99 by %c16_i32_38 dim 1 : vector<1x256xf32>, i32 -> vector<1x256xf32>
    %101 = arith.mulf %100, %20 : vector<1x256xf32>
    %c240_i32_39 = arith.constant 240 : i32
    %102 = tpu.dynamic_rotate %99 by %c240_i32_39 dim 1 : vector<1x256xf32>, i32 -> vector<1x256xf32>
    %103 = arith.mulf %102, %24 : vector<1x256xf32>
    %104 = arith.maximumf %101, %103 : vector<1x256xf32>
    %105 = arith.maximumf %104, %99 : vector<1x256xf32>
    %c1_i32_40 = arith.constant 1 : i32
    %106 = tpu.dynamic_rotate %105 by %c1_i32_40 dim 1 : vector<1x256xf32>, i32 -> vector<1x256xf32>
    %107 = arith.mulf %106, %28 : vector<1x256xf32>
    %c255_i32_41 = arith.constant 255 : i32
    %108 = tpu.dynamic_rotate %105 by %c255_i32_41 dim 1 : vector<1x256xf32>, i32 -> vector<1x256xf32>
    %109 = arith.mulf %108, %32 : vector<1x256xf32>
    %110 = arith.maximumf %107, %109 : vector<1x256xf32>
    %111 = arith.maximumf %110, %105 : vector<1x256xf32>
    %cst_42 = arith.constant 1.000000e-01 : f32
    %112 = vector.broadcast %cst_42 : f32 to vector<1x256xf32>
    %113 = arith.cmpf ogt, %98, %112 : vector<1x256xf32>
    %cst_43 = arith.constant 1.000000e-01 : f32
    %114 = vector.broadcast %cst_43 : f32 to vector<1x256xf32>
    %115 = arith.cmpf ogt, %111, %114 : vector<1x256xf32>
    %116 = arith.andi %113, %115 : vector<1x256xi1>
    %117 = arith.extui %116 : vector<1x256xi1> to vector<1x256xi32>
    %118 = arith.sitofp %117 : vector<1x256xi32> to vector<1x256xf32>
    %119 = vector.broadcast %118 : vector<1x256xf32> to vector<16x256xf32>
    %120 = arith.mulf %85, %119 : vector<16x256xf32>
    %c0_44 = arith.constant 0 : index
    %c0_45 = arith.constant 0 : index
    %121 = vector.load %arg6[%c0_44, %c0_45] : memref<16x256xf32, #tpu.memory_space<vmem>>, vector<16x256xf32>
    tpu.vector_store %arg6[%c0_44, %c0_45], %120 {strides = array<i32>} : memref<16x256xf32, #tpu.memory_space<vmem>>, vector<16x256xf32>,
    return
  }
  func.func @transform_0(%arg0: i32) -> (i32, i32) {
    %c0_i32 = arith.constant 0 : i32
    %c0_i32_0 = arith.constant 0 : i32
    return %arg0, %c0_i32 : i32, i32
  }
  func.func @transform_1(%arg0: i32) -> (i32, i32, i32) {
    %c0_i32 = arith.constant 0 : i32
    %c0_i32_0 = arith.constant 0 : i32
    %c0_i32_1 = arith.constant 0 : i32
    return %arg0, %c0_i32, %c0_i32_0 : i32, i32, i32
  }
  func.func @transform_2(%arg0: i32) -> (i32, i32) {
    %c0_i32 = arith.constant 0 : i32
    %c0_i32_0 = arith.constant 0 : i32
    %c0_i32_1 = arith.constant 0 : i32
    return %c0_i32, %c0_i32_0 : i32, i32
  }
  func.func @transform_3(%arg0: i32) -> (i32, i32) {
    %c0_i32 = arith.constant 0 : i32
    %c0_i32_0 = arith.constant 0 : i32
    %c0_i32_1 = arith.constant 0 : i32
    return %c0_i32, %c0_i32_0 : i32, i32
  }
  func.func @transform_4(%arg0: i32) -> (i32, i32) {
    %c0_i32 = arith.constant 0 : i32
    %c0_i32_0 = arith.constant 0 : i32
    %c0_i32_1 = arith.constant 0 : i32
    return %c0_i32, %c0_i32_0 : i32, i32
  }
  func.func @transform_5(%arg0: i32) -> (i32, i32) {
    %c0_i32 = arith.constant 0 : i32
    %c0_i32_0 = arith.constant 0 : i32
    return %arg0, %c0_i32 : i32, i32
  }
}

</mosaic_0001>

<llo_original>
// kernel: cann_forward.1
$region0: #{cann_forward.1}
  #allocation0 [shape = 'u32[]', space=smem, size = 0x4, offset = 0x4, fixed_abs, tag = 'smem constant byte address 0x4 - core index']
  #allocation1 [shape = 'u32[144,128]{1,0:T(1,128)}', space=vmem, size = 0x12000, scoped, tag = 'internal scratch']
  #allocation2 [shape = 'f32[48,256]{1,0:T(8,128)}', space=vmem, size = 0xc000, scoped, tag = 'scratch operand']
  #allocation3 [shape = 'f32[16,256]{1,0:T(8,128)}', space=vmem, size = 0x4000, scoped, tag = 'scratch operand']
  %s0 = inlined_call_operand.vmem [shape: f32[32,256], index: 0, kind: input, shape index: {}]
  %s1 = inlined_call_operand.vmem [shape: bf16[2,1,256], index: 1, kind: input, shape index: {}]
  %s2 = inlined_call_operand.vmem [shape: f32[128,48], index: 2, kind: input, shape index: {}]
  %s3 = inlined_call_operand.vmem [shape: f32[128,1], index: 3, kind: input, shape index: {}]
  %s4 = inlined_call_operand.vmem [shape: f32[16,128], index: 4, kind: input, shape index: {}]
  %s5 = inlined_call_operand.vmem [shape: f32[32,256], index: 5, kind: output, shape index: {}]
  %s6 = sld [smem:[#allocation0]]
  $region53: #{cann_forward.1} parent=0
    _
  %s8 = ssub.s32 1, %s6
  %s9 = scalar_select 0, %s8, %s6
  loop: start=0, step=1, limit=4
  $region2: #{cann_forward.1} parent=0 // loop_pre_header
    _
  $region3: #{cann_forward.1} parent=0 // loop_header
    %s11 = sphi 0, %s15
    %p12 = scmp.ge.s32.totalorder %s11, 4
    %s21 = sphi 0, %s23
    %s24 = sphi 0, %s21
    %s25 = sphi 0, %s24
    %s41 = sphi 0, %s25
    %s47 = sphi 0, %s49
    %s50 = sphi 0, %s47
    %s51 = sphi 0, %s50
    %s67 = sphi 0, %s51
    %s71 = sphi 0, %s71
    %s73 = sphi 0, %s71
    %s74 = sphi 0, %s73
    %s88 = sphi 0, %s74
    %s92 = sphi 0, %s92
    %s94 = sphi 0, %s92
    %s95 = sphi 0, %s94
    %s109 = sphi 0, %s95
    %s113 = sphi 0, %s113
    %s115 = sphi 0, %s113
    %s116 = sphi 0, %s115
    %s130 = sphi 0, %s116
    %s136 = sphi 0, %s138
    %s139 = sphi 0, %s136
    %s140 = sphi 0, %s139
    %s156 = sphi 0, %s140
  $region4: #{cann_forward.1} parent=0 // loop_header_branch
    %14 = sbr.rel (%p12) target = $region8
  $region5: #{cann_forward.1} parent=0 // loop_body
    %s16 = ssub.s32 %s11, 1
    %s17 = ssub.s32 %s11, 2
    %s18 = sadd.s32 %s11, 1
    %s19 = ssub.s32 %s11, %s18
    %p20 = scmp.eq.s32.totalorder %s19, 0
    %s22 = sadd.s32 %s21, 1
    %s23 = scalar_select %p20, %s21, %s22
    %p26 = pneg %p20
    %p27 = scmp.eq.s32.totalorder %s11, 1
    %p28 = por %p26, %p27
    %p29 = scmp.ne.s32.totalorder %s21, %s24
    %p30 = scmp.eq.s32.totalorder %s11, 0
    %p31 = por %p29, %p30
    %p32 = scmp.ne.s32.totalorder %s21, %s24
    %p33 = scmp.eq.s32.totalorder %s16, 1
    %p34 = por %p32, %p33
    %p35 = scmp.ne.s32.totalorder %s24, %s25
    %p36 = scmp.eq.s32.totalorder %s16, 0
    %p37 = por %p35, %p36
    %p38 = scmp.ne.s32.totalorder %s24, %s25
    %p39 = scmp.eq.s32.totalorder %s17, 1
    %p40 = por %p38, %p39
    %p42 = scmp.ne.s32.totalorder %s25, %s41
    %p43 = scmp.eq.s32.totalorder %s17, 0
    %p44 = por %p42, %p43
    %s45 = ssub.s32 %s11, %s18
    %p46 = scmp.eq.s32.totalorder %s45, 0
    %s48 = sadd.s32 %s47, 1
    %s49 = scalar_select %p46, %s47, %s48
    %p52 = pneg %p46
    %p53 = scmp.eq.s32.totalorder %s11, 1
    %p54 = por %p52, %p53
    %p55 = scmp.ne.s32.totalorder %s47, %s50
    %p56 = scmp.eq.s32.totalorder %s11, 0
    %p57 = por %p55, %p56
    %p58 = scmp.ne.s32.totalorder %s47, %s50
    %p59 = scmp.eq.s32.totalorder %s16, 1
    %p60 = por %p58, %p59
    %p61 = scmp.ne.s32.totalorder %s50, %s51
    %p62 = scmp.eq.s32.totalorder %s16, 0
    %p63 = por %p61, %p62
    %p64 = scmp.ne.s32.totalorder %s50, %s51
    %p65 = scmp.eq.s32.totalorder %s17, 1
    %p66 = por %p64, %p65
    %p68 = scmp.ne.s32.totalorder %s51, %s67
    %p69 = scmp.eq.s32.totalorder %s17, 0
    %p70 = por %p68, %p69
    %s72 = sadd.s32 %s71, 1
    %p75 = scmp.eq.s32.totalorder %s11, 1
    %p76 = scmp.ne.s32.totalorder %s71, %s73
    %p77 = scmp.eq.s32.totalorder %s11, 0
    %p78 = por %p76, %p77
    %p79 = scmp.ne.s32.totalorder %s71, %s73
    %p80 = scmp.eq.s32.totalorder %s16, 1
    %p81 = por %p79, %p80
    %p82 = scmp.ne.s32.totalorder %s73, %s74
    %p83 = scmp.eq.s32.totalorder %s16, 0
    %p84 = por %p82, %p83
    %p85 = scmp.ne.s32.totalorder %s73, %s74
    %p86 = scmp.eq.s32.totalorder %s17, 1
    %p87 = por %p85, %p86
    %p89 = scmp.ne.s32.totalorder %s74, %s88
    %p90 = scmp.eq.s32.totalorder %s17, 0
    %p91 = por %p89, %p90
    %s93 = sadd.s32 %s92, 1
    %p96 = scmp.eq.s32.totalorder %s11, 1
    %p97 = scmp.ne.s32.totalorder %s92, %s94
    %p98 = scmp.eq.s32.totalorder %s11, 0
    %p99 = por %p97, %p98
    %p100 = scmp.ne.s32.totalorder %s92, %s94
    %p101 = scmp.eq.s32.totalorder %s16, 1
    %p102 = por %p100, %p101
    %p103 = scmp.ne.s32.totalorder %s94, %s95
    %p104 = scmp.eq.s32.totalorder %s16, 0
    %p105 = por %p103, %p104
    %p106 = scmp.ne.s32.totalorder %s94, %s95
    %p107 = scmp.eq.s32.totalorder %s17, 1
    %p108 = por %p106, %p107
    %p110 = scmp.ne.s32.totalorder %s95, %s109
    %p111 = scmp.eq.s32.totalorder %s17, 0
    %p112 = por %p110, %p111
    %s114 = sadd.s32 %s113, 1
    %p117 = scmp.eq.s32.totalorder %s11, 1
    %p118 = scmp.ne.s32.totalorder %s113, %s115
    %p119 = scmp.eq.s32.totalorder %s11, 0
    %p120 = por %p118, %p119
    %p121 = scmp.ne.s32.totalorder %s113, %s115
    %p122 = scmp.eq.s32.totalorder %s16, 1
    %p123 = por %p121, %p122
    %p124 = scmp.ne.s32.totalorder %s115, %s116
    %p125 = scmp.eq.s32.totalorder %s16, 0
    %p126 = por %p124, %p125
    %p127 = scmp.ne.s32.totalorder %s115, %s116
    %p128 = scmp.eq.s32.totalorder %s17, 1
    %p129 = por %p127, %p128
    %p131 = scmp.ne.s32.totalorder %s116, %s130
    %p132 = scmp.eq.s32.totalorder %s17, 0
    %p133 = por %p131, %p132
    %s134 = ssub.s32 %s11, %s18
    %p135 = scmp.eq.s32.totalorder %s134, 0
    %s137 = sadd.s32 %s136, 1
    %s138 = scalar_select %p135, %s136, %s137
    %p141 = pneg %p135
    %p142 = scmp.eq.s32.totalorder %s11, 1
    %p143 = por %p141, %p142
    %p144 = scmp.ne.s32.totalorder %s136, %s139
    %p145 = scmp.eq.s32.totalorder %s11, 0
    %p146 = por %p144, %p145
    %p147 = scmp.ne.s32.totalorder %s136, %s139
    %p148 = scmp.eq.s32.totalorder %s16, 1
    %p149 = por %p147, %p148
    %p150 = scmp.ne.s32.totalorder %s139, %s140
    %p151 = scmp.eq.s32.totalorder %s16, 0
    %p152 = por %p150, %p151
    %p153 = scmp.ne.s32.totalorder %s139, %s140
    %p154 = scmp.eq.s32.totalorder %s17, 1
    %p155 = por %p153, %p154
    %p157 = scmp.ne.s32.totalorder %s140, %s156
    %p158 = scmp.eq.s32.totalorder %s17, 0
    %p159 = por %p157, %p158
    %p160 = scmp.le.s32.totalorder 1, %s11
    %p161 = scmp.lt.s32.totalorder %s11, 3
    %p162 = pnand %p160, %p161
    %p163 = pneg %p162
    // Predicated region
    $region9: #{cann_forward.1} parent=5 // pred_check
      _
    $region10: #{cann_forward.1} parent=5 // pred_check_branch
      %165 = sbr.rel (%p162) target = $region12
    $region11: #{cann_forward.1} parent=5 // pred_region
      %s166 = ssub.s32 %s11, 1
      // Predicated region
      $region13: #{cann_forward.1} parent=11 // pred_check
        %p167 = pneg %p84
      $region14: #{cann_forward.1} parent=11 // pred_check_branch
        %169 = sbr.rel (%p167) target = $region16
      $region15: #{cann_forward.1} parent=11 // pred_region
        _
      $region16: #{cann_forward.1} parent=11 // pred_fallthru
        _
      // Predicated region
      $region17: #{cann_forward.1} parent=11 // pred_check
        %p170 = pneg %p105
      $region18: #{cann_forward.1} parent=11 // pred_check_branch
        %172 = sbr.rel (%p170) target = $region20
      $region19: #{cann_forward.1} parent=11 // pred_region
        _
      $region20: #{cann_forward.1} parent=11 // pred_fallthru
        _
      // Predicated region
      $region21: #{cann_forward.1} parent=11 // pred_check
        %p173 = pneg %p126
      $region22: #{cann_forward.1} parent=11 // pred_check_branch
        %175 = sbr.rel (%p173) target = $region24
      $region23: #{cann_forward.1} parent=11 // pred_region
        _
      $region24: #{cann_forward.1} parent=11 // pred_fallthru
        _
    $region12: #{cann_forward.1} parent=5 // pred_fallthru
      _
    %p176 = scmp.lt.s32.totalorder %s11, 2
    // Predicated region
    $region25: #{cann_forward.1} parent=5 // pred_check
      %p177 = pneg %p176
    $region26: #{cann_forward.1} parent=5 // pred_check_branch
      %179 = sbr.rel (%p177) target = $region28
    $region27: #{cann_forward.1} parent=5 // pred_region
      // Predicated region
      $region29: #{cann_forward.1} parent=27 // pred_check
        %p180 = pneg %p31
      $region30: #{cann_forward.1} parent=27 // pred_check_branch
        %182 = sbr.rel (%p180) target = $region32
      $region31: #{cann_forward.1} parent=27 // pred_region
        %s183 = smul.u32 2, %s11
        %p184 = scmp.lt.s32.totalorder %s183, 3
        %s185 = scalar_select %p184, %s183, 3
        %s186 = smul.addr %s185, 2
        %s187 = smul.addr %s186, 8
        %s188 = scalar_lea.vmem %s0, %s187
        %s189 = smul.u32 2, %s11
      $region32: #{cann_forward.1} parent=27 // pred_fallthru
        _
      // Predicated region
      $region33: #{cann_forward.1} parent=27 // pred_check
        %p190 = pneg %p57
      $region34: #{cann_forward.1} parent=27 // pred_check_branch
        %192 = sbr.rel (%p190) target = $region36
      $region35: #{cann_forward.1} parent=27 // pred_region
        %p193 = scmp.lt.s32.totalorder %s11, 1
        %s194 = scalar_select %p193, %s11, 1
        %s195 = smul.addr %s194, 2
        %s196 = scalar_lea.vmem %s1, %s195
      $region36: #{cann_forward.1} parent=27 // pred_fallthru
        _
    $region28: #{cann_forward.1} parent=5 // pred_fallthru
      _
    %p197 = scmp.le.s32.totalorder 1, %s11
    %p198 = scmp.lt.s32.totalorder %s11, 3
    %p199 = pnand %p197, %p198
    %p200 = pneg %p199
    // Predicated region
    $region37: #{cann_forward.1} parent=5 // pred_check
      _
    $region38: #{cann_forward.1} parent=5 // pred_check_branch
      %202 = sbr.rel (%p199) target = $region40
    $region39: #{cann_forward.1} parent=5 // pred_region
      %s203 = ssub.s32 %s11, 1
      %s204 = smul.u32 2, %s16
      %p205 = scmp.lt.s32.totalorder %s204, 3
      %s206 = scalar_select %p205, %s204, 3
      %s207 = smul.addr %s206, 2
      %s208 = smul.addr %s207, 8
      %s209 = scalar_lea.vmem %s0, %s208
      %p210 = pneg %p37
      %p211 = pneg %p34
      %p212 = scmp.lt.s32.totalorder %s16, 1
      %s213 = scalar_select %p212, %s16, 1
      %s214 = smul.addr %s213, 2
      %s215 = scalar_lea.vmem %s1, %s214
      %p216 = pneg %p63
      %p217 = pneg %p60
      %p218 = pneg %p84
      %p219 = pneg %p81
      %p220 = pneg %p105
      %p221 = pneg %p102
      %p222 = pneg %p126
      %p223 = pneg %p123
      %p224 = pneg %p152
      %p225 = pneg %p149
      %s226 = smul.u32 2, %s16
      %p227 = scmp.lt.s32.totalorder %s226, 3
      %s228 = scalar_select %p227, %s226, 3
      %s229 = smul.addr %s228, 2
      %s230 = smul.addr %s229, 8
      %s231 = scalar_lea.vmem %s5, %s230
      %s232 = smul.u32 2, %s16
      %p233 = scmp.lt.s32.totalorder %s232, 3
      %s234 = scalar_select %p233, %s232, 3
      %s235 = smul.addr %s234, 2
      %s236 = smul.addr %s235, 8
      %s237 = scalar_lea.vmem %s0, %s236
      %s238 = smul.u32 2, %s16
      %p239 = scmp.lt.s32.totalorder %s16, 1
      %s240 = scalar_select %p239, %s16, 1
      %s241 = smul.addr %s240, 2
      %s242 = scalar_lea.vmem %s1, %s241
      %s243 = smul.u32 2, %s16
      %p244 = scmp.lt.s32.totalorder %s243, 3
      %s245 = scalar_select %p244, %s243, 3
      %s246 = smul.addr %s245, 2
      %s247 = smul.addr %s246, 8
      %s248 = scalar_lea.vmem %s5, %s247
      %s249 = smul.u32 2, %s16
      %v250 = vlaneseq
      %v251 = vand.u32 %v250, 127
      %v252 = vadd.s32 %v251, 128
      %vm253 = vcmp.lt.s32.totalorder %v251, 0
      %v254 = vsub.s32 0, %v251
      %v255 = vsel %vm253, %v254, %v251
      %v256 = vshrl.u32 %v255, 4
      %v257 = vand.u32 %v255, 15
      %v258 = vsub.s32 0, %v257
      %v259 = vsel %vm253, %v258, %v257
      %vm260 = vcmp.lt.s32.totalorder %v252, 0
      %v261 = vsub.s32 0, %v252
      %v262 = vsel %vm260, %v261, %v252
      %v263 = vshrl.u32 %v262, 4
      %v264 = vand.u32 %v262, 15
      %v265 = vsub.s32 0, %v264
      %v266 = vsel %vm260, %v265, %v264
      %vm267 = vcmp.ne.s32.totalorder %v259, 0
      %vm268 = vcmp.ne.s32.totalorder %v266, 0
      %vm269 = vcmp.lt.s32.totalorder %v259, 0
      %vm270 = vcmp.lt.s32.totalorder %v266, 0
      %vm271 = vmand %vm269, %vm267
      %vm272 = vmand %vm270, %vm268
      %v273 = vadd.s32 %v259, 16
      %v274 = vadd.s32 %v266, 16
      %v275 = vsel %vm271, %v273, %v259
      %v276 = vsel %vm272, %v274, %v266
      %vm277 = vcmp.ge.s32.totalorder %v251, 16
      %vm278 = vcmp.ge.s32.totalorder %v252, 16
      %v279 = vsel %vm277, 1, 0
      %v280 = vsel %vm278, 1, 0
      %v281 = vcvt.s32.f32 %v279
      %v282 = vcvt.s32.f32 %v280
      %vm283 = vcmp.lt.s32.totalorder %v251, 240
      %vm284 = vcmp.lt.s32.totalorder %v252, 240
      %v285 = vsel %vm283, 1, 0
      %v286 = vsel %vm284, 1, 0
      %v287 = vcvt.s32.f32 %v285
      %v288 = vcvt.s32.f32 %v286
      %vm289 = vcmp.ge.s32.totalorder %v275, 1
      %vm290 = vcmp.ge.s32.totalorder %v276, 1
      %v291 = vsel %vm289, 1, 0
      %v292 = vsel %vm290, 1, 0
      %v293 = vcvt.s32.f32 %v291
      %v294 = vcvt.s32.f32 %v292
      %vm295 = vcmp.le.s32.totalorder %v275, 14
      %vm296 = vcmp.le.s32.totalorder %v276, 14
      %v297 = vsel %vm295, 1, 0
      %v298 = vsel %vm296, 1, 0
      %v299 = vcvt.s32.f32 %v297
      %v300 = vcvt.s32.f32 %v298
      %v301 = vld [vmem:[%s237] sm:$0xff]
      %v302 = vld [vmem:[%s237 + $0x8] sm:$0xff]
      %v303 = vld [vmem:[%s237 + $0x10] sm:$0xff]
      %v304 = vld [vmem:[%s237 + $0x18] sm:$0xff]
      %305 = vrot.lane.b32.xlu0 %v301, 16
      %v306 = vpop.permute.xlu0 %305
      %307 = vrot.lane.b32.xlu0 %v303, 16
      %v308 = vpop.permute.xlu0 %307
      %309 = vrot.lane.b32.xlu0 %v302, 16
      %v310 = vpop.permute.xlu0 %309
      %311 = vrot.lane.b32.xlu0 %v304, 16
      %v312 = vpop.permute.xlu0 %311
      %vm313 = vcmp.lt.s32.totalorder %v251, 16
      %v314 = vsel %vm313, %v306, %v310
      %v315 = vsel %vm313, %v308, %v312
      %v316 = vsel %vm313, %v310, %v306
      %v317 = vsel %vm313, %v312, %v308
      %v318 = vmul.f32 %v316, %v281
      %v319 = vmul.f32 %v314, %v282
      %v320 = vmul.f32 %v317, %v281
      %v321 = vmul.f32 %v315, %v282
      %322 = vrot.lane.b32.xlu0 %v301, 112
      %v323 = vpop.permute.xlu0 %322
      %324 = vrot.lane.b32.xlu0 %v303, 112
      %v325 = vpop.permute.xlu0 %324
      %326 = vrot.lane.b32.xlu0 %v302, 112
      %v327 = vpop.permute.xlu0 %326
      %328 = vrot.lane.b32.xlu0 %v304, 112
      %v329 = vpop.permute.xlu0 %328
      %vm330 = vcmp.lt.s32.totalorder %v251, 112
      %v331 = vsel %vm330, %v323, %v327
      %v332 = vsel %vm330, %v325, %v329
      %v333 = vsel %vm330, %v327, %v323
      %v334 = vsel %vm330, %v329, %v325
      %v335 = vmul.f32 %v331, %v287
      %v336 = vmul.f32 %v333, %v288
      %v337 = vmul.f32 %v332, %v287
      %v338 = vmul.f32 %v334, %v288
      %v339 = vmul.f32 %v301, 2.0
      %v340 = vmul.f32 %v302, 2.0
      %v341 = vmul.f32 %v303, 2.0
      %v342 = vmul.f32 %v304, 2.0
      %v343 = vadd.f32 %v318, %v339
      %v344 = vadd.f32 %v319, %v340
      %v345 = vadd.f32 %v320, %v341
      %v346 = vadd.f32 %v321, %v342
      %v347 = vadd.f32 %v343, %v335
      %v348 = vadd.f32 %v344, %v336
      %v349 = vadd.f32 %v345, %v337
      %v350 = vadd.f32 %v346, %v338
      %v351 = vsub.f32 %v335, %v318
      %v352 = vsub.f32 %v336, %v319
      %v353 = vsub.f32 %v337, %v320
      %v354 = vsub.f32 %v338, %v321
      %355 = vrot.lane.b32.xlu0 %v347, 127
      %v356 = vpop.permute.xlu0 %355
      %357 = vrot.lane.b32.xlu0 %v349, 127
      %v358 = vpop.permute.xlu0 %357
      %359 = vrot.lane.b32.xlu0 %v348, 127
      %v360 = vpop.permute.xlu0 %359
      %361 = vrot.lane.b32.xlu0 %v350, 127
      %v362 = vpop.permute.xlu0 %361
      %vm363 = vcmp.lt.s32.totalorder %v251, 127
      %v364 = vsel %vm363, %v356, %v360
      %v365 = vsel %vm363, %v358, %v362
      %v366 = vsel %vm363, %v360, %v356
      %v367 = vsel %vm363, %v362, %v358
      %v368 = vmul.f32 %v364, %v299
      %v369 = vmul.f32 %v366, %v300
      %v370 = vmul.f32 %v365, %v299
      %v371 = vmul.f32 %v367, %v300
      %372 = vrot.lane.b32.xlu0 %v347, 1
      %v373 = vpop.permute.xlu0 %372
      %374 = vrot.lane.b32.xlu0 %v349, 1
      %v375 = vpop.permute.xlu0 %374
      %376 = vrot.lane.b32.xlu0 %v348, 1
      %v377 = vpop.permute.xlu0 %376
      %378 = vrot.lane.b32.xlu0 %v350, 1
      %v379 = vpop.permute.xlu0 %378
      %vm380 = vcmp.lt.s32.totalorder %v251, 1
      %v381 = vsel %vm380, %v373, %v377
      %v382 = vsel %vm380, %v375, %v379
      %v383 = vsel %vm380, %v377, %v373
      %v384 = vsel %vm380, %v379, %v375
      %v385 = vmul.f32 %v383, %v293
      %v386 = vmul.f32 %v381, %v294
      %v387 = vmul.f32 %v384, %v293
      %v388 = vmul.f32 %v382, %v294
      %v389 = vsub.f32 %v368, %v385
      %v390 = vsub.f32 %v369, %v386
      %v391 = vsub.f32 %v370, %v387
      %v392 = vsub.f32 %v371, %v388
      %v393 = vmul.f32 %v389, 0.125
      %v394 = vmul.f32 %v390, 0.125
      %v395 = vmul.f32 %v391, 0.125
      %v396 = vmul.f32 %v392, 0.125
      %397 = vrot.lane.b32.xlu0 %v351, 1
      %v398 = vpop.permute.xlu0 %397
      %399 = vrot.lane.b32.xlu0 %v353, 1
      %v400 = vpop.permute.xlu0 %399
      %401 = vrot.lane.b32.xlu0 %v352, 1
      %v402 = vpop.permute.xlu0 %401
      %403 = vrot.lane.b32.xlu0 %v354, 1
      %v404 = vpop.permute.xlu0 %403
      %v405 = vsel %vm380, %v398, %v402
      %v406 = vsel %vm380, %v400, %v404
      %v407 = vsel %vm380, %v402, %v398
      %v408 = vsel %vm380, %v404, %v400
      %v409 = vmul.f32 %v407, %v293
      %v410 = vmul.f32 %v405, %v294
      %v411 = vmul.f32 %v408, %v293
      %v412 = vmul.f32 %v406, %v294
      %v413 = vmul.f32 %v351, 2.0
      %v414 = vmul.f32 %v352, 2.0
      %v415 = vmul.f32 %v353, 2.0
      %v416 = vmul.f32 %v354, 2.0
      %v417 = vadd.f32 %v409, %v413
      %v418 = vadd.f32 %v410, %v414
      %v419 = vadd.f32 %v411, %v415
      %v420 = vadd.f32 %v412, %v416
      %421 = vrot.lane.b32.xlu0 %v351, 127
      %v422 = vpop.permute.xlu0 %421
      %423 = vrot.lane.b32.xlu0 %v353, 127
      %v424 = vpop.permute.xlu0 %423
      %425 = vrot.lane.b32.xlu0 %v352, 127
      %v426 = vpop.permute.xlu0 %425
      %427 = vrot.lane.b32.xlu0 %v354, 127
      %v428 = vpop.permute.xlu0 %427
      %v429 = vsel %vm363, %v422, %v426
      %v430 = vsel %vm363, %v424, %v428
      %v431 = vsel %vm363, %v426, %v422
      %v432 = vsel %vm363, %v428, %v424
      %v433 = vmul.f32 %v429, %v299
      %v434 = vmul.f32 %v431, %v300
      %v435 = vmul.f32 %v430, %v299
      %v436 = vmul.f32 %v432, %v300
      %v437 = vadd.f32 %v417, %v433
      %v438 = vadd.f32 %v418, %v434
      %v439 = vadd.f32 %v419, %v435
      %v440 = vadd.f32 %v420, %v436
      %v441 = vmul.f32 %v437, 0.125
      %v442 = vmul.f32 %v438, 0.125
      %v443 = vmul.f32 %v439, 0.125
      %v444 = vmul.f32 %v440, 0.125
      %445 = vst [vmem:[#allocation2] sm:$0xff] %v301
      %446 = vst [vmem:[#allocation2 + $0x8] sm:$0xff] %v302
      %447 = vst [vmem:[#allocation2 + $0x10] sm:$0xff] %v303
      %448 = vst [vmem:[#allocation2 + $0x18] sm:$0xff] %v304
      %449 = vst [vmem:[#allocation2 + $0x20] sm:$0xff] %v393
      %450 = vst [vmem:[#allocation2 + $0x28] sm:$0xff] %v394
      %451 = vst [vmem:[#allocation2 + $0x30] sm:$0xff] %v395
      %452 = vst [vmem:[#allocation2 + $0x38] sm:$0xff] %v396
      %453 = vst [vmem:[#allocation2 + $0x40] sm:$0xff] %v441
      %454 = vst [vmem:[#allocation2 + $0x48] sm:$0xff] %v442
      %455 = vst [vmem:[#allocation2 + $0x50] sm:$0xff] %v443
      %456 = vst [vmem:[#allocation2 + $0x58] sm:$0xff] %v444
      %v457 = vld [vmem:[%s2] sm:$0xff]
      %v458 = vld [vmem:[%s2 + $0x8] sm:$0xff]
      %v459 = vld [vmem:[%s2 + $0x10] sm:$0xff]
      %v460 = vld [vmem:[%s2 + $0x18] sm:$0xff]
      %v461 = vld [vmem:[%s2 + $0x20] sm:$0xff]
      %v462 = vld [vmem:[%s2 + $0x28] sm:$0xff]
      %v463 = vld [vmem:[%s2 + $0x30] sm:$0xff]
      %v464 = vld [vmem:[%s2 + $0x38] sm:$0xff]
      %v465 = vld [vmem:[%s2 + $0x40] sm:$0xff]
      %v466 = vld [vmem:[%s2 + $0x48] sm:$0xff]
      %v467 = vld [vmem:[%s2 + $0x50] sm:$0xff]
      %v468 = vld [vmem:[%s2 + $0x58] sm:$0xff]
      %v469 = vld [vmem:[%s2 + $0x60] sm:$0xff]
      %v470 = vld [vmem:[%s2 + $0x68] sm:$0xff]
      %v471 = vld [vmem:[%s2 + $0x70] sm:$0xff]
      %v472 = vld [vmem:[%s2 + $0x78] sm:$0xff]
      %v473 = vld [vmem:[%s3] sm:$0xff]
      %v474 = vld [vmem:[%s3 + $0x8] sm:$0xff]
      %v475 = vld [vmem:[%s3 + $0x10] sm:$0xff]
      %v476 = vld [vmem:[%s3 + $0x18] sm:$0xff]
      %v477 = vld [vmem:[%s3 + $0x20] sm:$0xff]
      %v478 = vld [vmem:[%s3 + $0x28] sm:$0xff]
      %v479 = vld [vmem:[%s3 + $0x30] sm:$0xff]
      %v480 = vld [vmem:[%s3 + $0x38] sm:$0xff]
      %v481 = vld [vmem:[%s3 + $0x40] sm:$0xff]
      %v482 = vld [vmem:[%s3 + $0x48] sm:$0xff]
      %v483 = vld [vmem:[%s3 + $0x50] sm:$0xff]
      %v484 = vld [vmem:[%s3 + $0x58] sm:$0xff]
      %v485 = vld [vmem:[%s3 + $0x60] sm:$0xff]
      %v486 = vld [vmem:[%s3 + $0x68] sm:$0xff]
      %v487 = vld [vmem:[%s3 + $0x70] sm:$0xff]
      %v488 = vld [vmem:[%s3 + $0x78] sm:$0xff]
      %v489 = vld [vmem:[%s4] sm:$0xff]
      %v490 = vld [vmem:[%s4 + $0x8] sm:$0xff]
      %v491 = vld [vmem:[#allocation2] sm:$0xff]
      %v492 = vld [vmem:[#allocation2 + $0x8] sm:$0xff]
      %v493 = vld [vmem:[#allocation2 + $0x10] sm:$0xff]
      %v494 = vld [vmem:[#allocation2 + $0x18] sm:$0xff]
      %v495 = vld [vmem:[#allocation2 + $0x20] sm:$0xff]
      %v496 = vld [vmem:[#allocation2 + $0x28] sm:$0xff]
      %v497 = vld [vmem:[#allocation2 + $0x30] sm:$0xff]
      %v498 = vld [vmem:[#allocation2 + $0x38] sm:$0xff]
      %v499 = vld [vmem:[#allocation2 + $0x40] sm:$0xff]
      %v500 = vld [vmem:[#allocation2 + $0x48] sm:$0xff]
      %v501 = vld [vmem:[#allocation2 + $0x50] sm:$0xff]
      %v502 = vld [vmem:[#allocation2 + $0x58] sm:$0xff]
      %504 = vset.pattern.permute.xlu0 0
      %505 = vperm.xlu0 %504, %v473
      %v506 = vpop.permute.xlu0 %505
      %509 = vset.pattern.permute.xlu0 0
      %510 = vperm.xlu0 %509, %v474
      %v511 = vpop.permute.xlu0 %510
      %514 = vset.pattern.permute.xlu0 0
      %515 = vperm.xlu0 %514, %v475
      %v516 = vpop.permute.xlu0 %515
      %519 = vset.pattern.permute.xlu0 0
      %520 = vperm.xlu0 %519, %v476
      %v521 = vpop.permute.xlu0 %520
      %524 = vset.pattern.permute.xlu0 0
      %525 = vperm.xlu0 %524, %v477
      %v526 = vpop.permute.xlu0 %525
      %529 = vset.pattern.permute.xlu0 0
      %530 = vperm.xlu0 %529, %v478
      %v531 = vpop.permute.xlu0 %530
      %534 = vset.pattern.permute.xlu0 0
      %535 = vperm.xlu0 %534, %v479
      %v536 = vpop.permute.xlu0 %535
      %539 = vset.pattern.permute.xlu0 0
      %540 = vperm.xlu0 %539, %v480
      %v541 = vpop.permute.xlu0 %540
      %544 = vset.pattern.permute.xlu0 0
      %545 = vperm.xlu0 %544, %v481
      %v546 = vpop.permute.xlu0 %545
      %549 = vset.pattern.permute.xlu0 0
      %550 = vperm.xlu0 %549, %v482
      %v551 = vpop.permute.xlu0 %550
      %554 = vset.pattern.permute.xlu0 0
      %555 = vperm.xlu0 %554, %v483
      %v556 = vpop.permute.xlu0 %555
      %559 = vset.pattern.permute.xlu0 0
      %560 = vperm.xlu0 %559, %v484
      %v561 = vpop.permute.xlu0 %560
      %564 = vset.pattern.permute.xlu0 0
      %565 = vperm.xlu0 %564, %v485
      %v566 = vpop.permute.xlu0 %565
      %569 = vset.pattern.permute.xlu0 0
      %570 = vperm.xlu0 %569, %v486
      %v571 = vpop.permute.xlu0 %570
      %574 = vset.pattern.permute.xlu0 0
      %575 = vperm.xlu0 %574, %v487
      %v576 = vpop.permute.xlu0 %575
      %579 = vset.pattern.permute.xlu0 0
      %580 = vperm.xlu0 %579, %v488
      %v581 = vpop.permute.xlu0 %580
      %vm583 = vcmask 392192
      %v585 = vsel %vm583, %v457, 0
      %v588 = vsel %vm583, %v458, 0
      %v591 = vsel %vm583, %v459, 0
      %v594 = vsel %vm583, %v460, 0
      %v597 = vsel %vm583, %v461, 0
      %v600 = vsel %vm583, %v462, 0
      %v603 = vsel %vm583, %v463, 0
      %v606 = vsel %vm583, %v464, 0
      %v609 = vsel %vm583, %v465, 0
      %v612 = vsel %vm583, %v466, 0
      %v615 = vsel %vm583, %v467, 0
      %v618 = vsel %vm583, %v468, 0
      %v621 = vsel %vm583, %v469, 0
      %v624 = vsel %vm583, %v470, 0
      %v627 = vsel %vm583, %v471, 0
      %v630 = vsel %vm583, %v472, 0
      %632 = vmatprep.subr.mxu0 %v492
      %633 = vmatpush1.msra.mxu0 %v491
      %634 = vmatprep.subr.mxu0 %v494
      %635 = vmatpush1.msra.mxu0 %v493
      %636 = vmatprep.subr.mxu0 %v496
      %637 = vmatpush1.msra.mxu0 %v495
      %638 = vmatprep.subr.mxu0 %v498
      %639 = vmatpush1.msra.mxu0 %v497
      %640 = vmatprep.subr.mxu0 %v500
      %641 = vmatpush1.msra.mxu0 %v499
      %642 = vmatprep.subr.mxu0 %v502
      %643 = vmatpush1.msra.mxu0 %v501
      %644 = vmatprep.subr.mxu0 0.0
      %645 = vmatpush1.msra.mxu0 0.0
      %646 = vmatprep.subr.mxu0 0.0
      %647 = vmatpush1.msra.mxu0 0.0
      %648 = vmatprep.subr.mxu0 0.0
      %649 = vmatpush1.msra.mxu0 0.0
      %650 = vmatprep.subr.mxu0 0.0
      %651 = vmatpush1.msra.mxu0 0.0
      %652 = vmatprep.subr.mxu0 0.0
      %653 = vmatpush1.msra.mxu0 0.0
      %654 = vmatprep.subr.mxu0 0.0
      %655 = vmatpush1.msra.mxu0 0.0
      %656 = vmatprep.subr.mxu0 0.0
      %657 = vmatpush1.msra.mxu0 0.0
      %658 = vmatprep.subr.mxu0 0.0
      %659 = vmatpush1.msra.mxu0 0.0
      %660 = vmatprep.subr.mxu0 0.0
      %661 = vmatpush1.msra.mxu0 0.0
      %662 = vmatprep.subr.mxu0 0.0
      %663 = vmatpush1.msra.mxu0 0.0
      %664 = vmatprep.subr.mxu0 0.0
      %665 = vmatpush1.msra.mxu0 0.0
      %666 = vmatprep.subr.mxu0 0.0
      %667 = vmatpush1.msra.mxu0 0.0
      %668 = vmatprep.subr.mxu0 0.0
      %669 = vmatpush1.msra.mxu0 0.0
      %670 = vmatprep.subr.mxu0 0.0
      %671 = vmatpush1.msra.mxu0 0.0
      %672 = vmatprep.subr.mxu0 0.0
      %673 = vmatpush1.msra.mxu0 0.0
      %674 = vmatprep.subr.mxu0 0.0
      %675 = vmatpush1.msra.mxu0 0.0
      %676 = vmatprep.subr.mxu0 0.0
      %677 = vmatpush1.msra.mxu0 0.0
      %678 = vmatprep.subr.mxu0 0.0
      %679 = vmatpush1.msra.mxu0 0.0
      %680 = vmatprep.subr.mxu0 0.0
      %681 = vmatpush1.msra.mxu0 0.0
      %682 = vmatprep.subr.mxu0 0.0
      %683 = vmatpush1.msra.mxu0 0.0
      %684 = vmatprep.subr.mxu0 0.0
      %685 = vmatpush1.msra.mxu0 0.0
      %686 = vmatprep.subr.mxu0 0.0
      %687 = vmatpush1.msra.mxu0 0.0
      %688 = vmatprep.subr.mxu0 0.0
      %689 = vmatpush1.msra.mxu0 0.0
      %690 = vmatprep.subr.mxu0 0.0
      %691 = vmatpush1.msra.mxu0 0.0
      %692 = vmatprep.subr.mxu0 0.0
      %693 = vmatpush1.msra.mxu0 0.0
      %694 = vmatprep.subr.mxu0 0.0
      %695 = vmatpush1.msra.mxu0 0.0
      %696 = vmatprep.mubr.f32.mxu0 0.0
      %697 = vmatmul.mubr.f32.gmra.mrb[0].mxu0 %v585
      %v698 = vpop.f32.mrb[0].mxu0
      %v699 = vadd.f32 %v506, %v698
      %v700 = vpop.f32.mrb[0].mxu0
      %v701 = vadd.f32 %v506, %v700
      %702 = vmatprep.mubr.f32.mxu0 0.0
      %703 = vmatmul.mubr.f32.gmra.mrb[0].mxu0 %v588
      %v704 = vpop.f32.mrb[0].mxu0
      %v705 = vadd.f32 %v511, %v704
      %v706 = vpop.f32.mrb[0].mxu0
      %v707 = vadd.f32 %v511, %v706
      %708 = vmatprep.mubr.f32.mxu0 0.0
      %709 = vmatmul.mubr.f32.gmra.mrb[0].mxu0 %v591
      %v710 = vpop.f32.mrb[0].mxu0
      %v711 = vadd.f32 %v516, %v710
      %v712 = vpop.f32.mrb[0].mxu0
      %v713 = vadd.f32 %v516, %v712
      %714 = vmatprep.mubr.f32.mxu0 0.0
      %715 = vmatmul.mubr.f32.gmra.mrb[0].mxu0 %v594
      %v716 = vpop.f32.mrb[0].mxu0
      %v717 = vadd.f32 %v521, %v716
      %v718 = vpop.f32.mrb[0].mxu0
      %v719 = vadd.f32 %v521, %v718
      %720 = vmatprep.mubr.f32.mxu0 0.0
      %721 = vmatmul.mubr.f32.gmra.mrb[0].mxu0 %v597
      %v722 = vpop.f32.mrb[0].mxu0
      %v723 = vadd.f32 %v526, %v722
      %v724 = vpop.f32.mrb[0].mxu0
      %v725 = vadd.f32 %v526, %v724
      %726 = vmatprep.mubr.f32.mxu0 0.0
      %727 = vmatmul.mubr.f32.gmra.mrb[0].mxu0 %v600
      %v728 = vpop.f32.mrb[0].mxu0
      %v729 = vadd.f32 %v531, %v728
      %v730 = vpop.f32.mrb[0].mxu0
      %v731 = vadd.f32 %v531, %v730
      %732 = vmatprep.mubr.f32.mxu0 0.0
      %733 = vmatmul.mubr.f32.gmra.mrb[0].mxu0 %v603
      %v734 = vpop.f32.mrb[0].mxu0
      %v735 = vadd.f32 %v536, %v734
      %v736 = vpop.f32.mrb[0].mxu0
      %v737 = vadd.f32 %v536, %v736
      %738 = vmatprep.mubr.f32.mxu0 0.0
      %739 = vmatmul.mubr.f32.gmra.mrb[0].mxu0 %v606
      %v740 = vpop.f32.mrb[0].mxu0
      %v741 = vadd.f32 %v541, %v740
      %v742 = vpop.f32.mrb[0].mxu0
      %v743 = vadd.f32 %v541, %v742
      %744 = vmatprep.mubr.f32.mxu0 0.0
      %745 = vmatmul.mubr.f32.gmra.mrb[0].mxu0 %v609
      %v746 = vpop.f32.mrb[0].mxu0
      %v747 = vadd.f32 %v546, %v746
      %v748 = vpop.f32.mrb[0].mxu0
      %v749 = vadd.f32 %v546, %v748
      %750 = vmatprep.mubr.f32.mxu0 0.0
      %751 = vmatmul.mubr.f32.gmra.mrb[0].mxu0 %v612
      %v752 = vpop.f32.mrb[0].mxu0
      %v753 = vadd.f32 %v551, %v752
      %v754 = vpop.f32.mrb[0].mxu0
      %v755 = vadd.f32 %v551, %v754
      %756 = vmatprep.mubr.f32.mxu0 0.0
      %757 = vmatmul.mubr.f32.gmra.mrb[0].mxu0 %v615
      %v758 = vpop.f32.mrb[0].mxu0
      %v759 = vadd.f32 %v556, %v758
      %v760 = vpop.f32.mrb[0].mxu0
      %v761 = vadd.f32 %v556, %v760
      %762 = vmatprep.mubr.f32.mxu0 0.0
      %763 = vmatmul.mubr.f32.gmra.mrb[0].mxu0 %v618
      %v764 = vpop.f32.mrb[0].mxu0
      %v765 = vadd.f32 %v561, %v764
      %v766 = vpop.f32.mrb[0].mxu0
      %v767 = vadd.f32 %v561, %v766
      %768 = vmatprep.mubr.f32.mxu0 0.0
      %769 = vmatmul.mubr.f32.gmra.mrb[0].mxu0 %v621
      %v770 = vpop.f32.mrb[0].mxu0
      %v771 = vadd.f32 %v566, %v770
      %v772 = vpop.f32.mrb[0].mxu0
      %v773 = vadd.f32 %v566, %v772
      %774 = vmatprep.mubr.f32.mxu0 0.0
      %775 = vmatmul.mubr.f32.gmra.mrb[0].mxu0 %v624
      %v776 = vpop.f32.mrb[0].mxu0
      %v777 = vadd.f32 %v571, %v776
      %v778 = vpop.f32.mrb[0].mxu0
      %v779 = vadd.f32 %v571, %v778
      %780 = vmatprep.mubr.f32.mxu0 0.0
      %781 = vmatmul.mubr.f32.gmra.mrb[0].mxu0 %v627
      %v782 = vpop.f32.mrb[0].mxu0
      %v783 = vadd.f32 %v576, %v782
      %v784 = vpop.f32.mrb[0].mxu0
      %v785 = vadd.f32 %v576, %v784
      %786 = vmatprep.mubr.f32.mxu0 0.0
      %787 = vmatmul.mubr.f32.gmra.mrb[0].mxu0 %v630
      %v788 = vpop.f32.mrb[0].mxu0
      %v789 = vadd.f32 %v581, %v788
      %v790 = vpop.f32.mrb[0].mxu0
      %v791 = vadd.f32 %v581, %v790
      %792 = vdwg.mxu0
      %v793 = vmax.f32 %v699, 0.0
      %v794 = vmax.f32 %v701, 0.0
      %v795 = vmax.f32 %v705, 0.0
      %v796 = vmax.f32 %v707, 0.0
      %v797 = vmax.f32 %v711, 0.0
      %v798 = vmax.f32 %v713, 0.0
      %v799 = vmax.f32 %v717, 0.0
      %v800 = vmax.f32 %v719, 0.0
      %v801 = vmax.f32 %v723, 0.0
      %v802 = vmax.f32 %v725, 0.0
      %v803 = vmax.f32 %v729, 0.0
      %v804 = vmax.f32 %v731, 0.0
      %v805 = vmax.f32 %v735, 0.0
      %v806 = vmax.f32 %v737, 0.0
      %v807 = vmax.f32 %v741, 0.0
      %v808 = vmax.f32 %v743, 0.0
      %v809 = vmax.f32 %v747, 0.0
      %v810 = vmax.f32 %v749, 0.0
      %v811 = vmax.f32 %v753, 0.0
      %v812 = vmax.f32 %v755, 0.0
      %v813 = vmax.f32 %v759, 0.0
      %v814 = vmax.f32 %v761, 0.0
      %v815 = vmax.f32 %v765, 0.0
      %v816 = vmax.f32 %v767, 0.0
      %v817 = vmax.f32 %v771, 0.0
      %v818 = vmax.f32 %v773, 0.0
      %v819 = vmax.f32 %v777, 0.0
      %v820 = vmax.f32 %v779, 0.0
      %v821 = vmax.f32 %v783, 0.0
      %v822 = vmax.f32 %v785, 0.0
      %v823 = vmax.f32 %v789, 0.0
      %v824 = vmax.f32 %v791, 0.0
      %825 = vmatprep.subr.mxu0 %v794
      %826 = vmatpush1.msra.mxu0 %v793
      %827 = vmatprep.subr.mxu0 %v796
      %828 = vmatpush1.msra.mxu0 %v795
      %829 = vmatprep.subr.mxu0 %v798
      %830 = vmatpush1.msra.mxu0 %v797
      %831 = vmatprep.subr.mxu0 %v800
      %832 = vmatpush1.msra.mxu0 %v799
      %833 = vmatprep.subr.mxu0 %v802
      %834 = vmatpush1.msra.mxu0 %v801
      %835 = vmatprep.subr.mxu0 %v804
      %836 = vmatpush1.msra.mxu0 %v803
      %837 = vmatprep.subr.mxu0 %v806
      %838 = vmatpush1.msra.mxu0 %v805
      %839 = vmatprep.subr.mxu0 %v808
      %840 = vmatpush1.msra.mxu0 %v807
      %841 = vmatprep.subr.mxu0 %v810
      %842 = vmatpush1.msra.mxu0 %v809
      %843 = vmatprep.subr.mxu0 %v812
      %844 = vmatpush1.msra.mxu0 %v811
      %845 = vmatprep.subr.mxu0 %v814
      %846 = vmatpush1.msra.mxu0 %v813
      %847 = vmatprep.subr.mxu0 %v816
      %848 = vmatpush1.msra.mxu0 %v815
      %849 = vmatprep.subr.mxu0 %v818
      %850 = vmatpush1.msra.mxu0 %v817
      %851 = vmatprep.subr.mxu0 %v820
      %852 = vmatpush1.msra.mxu0 %v819
      %853 = vmatprep.subr.mxu0 %v822
      %854 = vmatpush1.msra.mxu0 %v821
      %855 = vmatprep.subr.mxu0 %v824
      %856 = vmatpush1.msra.mxu0 %v823
      %857 = vmatprep.subr.mxu0 0.0
      %858 = vmatpush1.msra.mxu0 0.0
      %859 = vmatprep.subr.mxu0 0.0
      %860 = vmatpush1.msra.mxu0 0.0
      %861 = vmatprep.subr.mxu0 0.0
      %862 = vmatpush1.msra.mxu0 0.0
      %863 = vmatprep.subr.mxu0 0.0
      %864 = vmatpush1.msra.mxu0 0.0
      %865 = vmatprep.subr.mxu0 0.0
      %866 = vmatpush1.msra.mxu0 0.0
      %867 = vmatprep.subr.mxu0 0.0
      %868 = vmatpush1.msra.mxu0 0.0
      %869 = vmatprep.subr.mxu0 0.0
      %870 = vmatpush1.msra.mxu0 0.0
      %871 = vmatprep.subr.mxu0 0.0
      %872 = vmatpush1.msra.mxu0 0.0
      %873 = vmatprep.subr.mxu0 0.0
      %874 = vmatpush1.msra.mxu0 0.0
      %875 = vmatprep.subr.mxu0 0.0
      %876 = vmatpush1.msra.mxu0 0.0
      %877 = vmatprep.subr.mxu0 0.0
      %878 = vmatpush1.msra.mxu0 0.0
      %879 = vmatprep.subr.mxu0 0.0
      %880 = vmatpush1.msra.mxu0 0.0
      %881 = vmatprep.subr.mxu0 0.0
      %882 = vmatpush1.msra.mxu0 0.0
      %883 = vmatprep.subr.mxu0 0.0
      %884 = vmatpush1.msra.mxu0 0.0
      %885 = vmatprep.subr.mxu0 0.0
      %886 = vmatpush1.msra.mxu0 0.0
      %887 = vmatprep.subr.mxu0 0.0
      %888 = vmatpush1.msra.mxu0 0.0
      %889 = vmatprep.mubr.f32.mxu0 0.0
      %890 = vmatmul.mubr.f32.gmra.mrb[0].mxu0 %v489
      %v891 = vpop.f32.mrb[0].mxu0
      %v892 = vadd.f32 0.0, %v891
      %v893 = vpop.f32.mrb[0].mxu0
      %v894 = vadd.f32 0.0, %v893
      %895 = vmatprep.mubr.f32.mxu0 0.0
      %896 = vmatmul.mubr.f32.gmra.mrb[0].mxu0 %v490
      %v897 = vpop.f32.mrb[0].mxu0
      %v898 = vadd.f32 0.0, %v897
      %v899 = vpop.f32.mrb[0].mxu0
      %v900 = vadd.f32 0.0, %v899
      %901 = vdwg.mxu0
      %v902 = vld [vmem:[%s237] sm:$0xff]
      %v903 = vld [vmem:[%s237 + $0x8] sm:$0xff]
      %v904 = vld [vmem:[%s237 + $0x10] sm:$0xff]
      %v905 = vld [vmem:[%s237 + $0x18] sm:$0xff]
      %v906 = vld [vmem:[%s242] sm:$0x3]
      %v907 = vunpack.c.l.bf16 %v906
      %v909 = vlaneseq
      %v910 = vshrl.u32 %v909, 7
      %v911 = vsub.s32 0, %v910
      %v912 = vrot.slane %v907, %v911
      %v913 = vlaneseq
      %v914 = vshrl.u32 %v913, 7
      %v915 = vsub.s32 2, %v914
      %v916 = vrot.slane %v907, %v915
      %v919 = vlaneseq
      %v920 = vshrl.u32 %v919, 7
      %v921 = vsub.s32 0, %v920
      %v922 = vrot.slane %v912, %v921
      %v923 = vlaneseq
      %v924 = vshrl.u32 %v923, 7
      %v925 = vsub.s32 0, %v924
      %v926 = vrot.slane %v916, %v925
      %v927 = vmul.f32 %v892, %v922
      %v928 = vmul.f32 %v894, %v926
      %v929 = vmul.f32 %v898, %v922
      %v930 = vmul.f32 %v900, %v926
      %v931 = vadd.f32 %v902, %v927
      %v932 = vadd.f32 %v903, %v928
      %v933 = vadd.f32 %v904, %v929
      %v934 = vadd.f32 %v905, %v930
      %v937 = vrot.slane %v902, 3
      %v938 = vrot.slane %v903, 3
      %941 = vrot.lane.b32.xlu0 %v937, 16
      %v942 = vpop.permute.xlu0 %941
      %943 = vrot.lane.b32.xlu0 %v938, 16
      %v944 = vpop.permute.xlu0 %943
      %v945 = vsel %vm313, %v942, %v944
      %v946 = vsel %vm313, %v944, %v942
      %v947 = vmul.f32 %v946, %v281
      %v948 = vmul.f32 %v945, %v282
      %949 = vrot.lane.b32.xlu0 %v937, 112
      %v950 = vpop.permute.xlu0 %949
      %951 = vrot.lane.b32.xlu0 %v938, 112
      %v952 = vpop.permute.xlu0 %951
      %v953 = vsel %vm330, %v950, %v952
      %v954 = vsel %vm330, %v952, %v950
      %v955 = vmul.f32 %v953, %v287
      %v956 = vmul.f32 %v954, %v288
      %v957 = vmax.f32 %v947, %v955
      %v958 = vmax.f32 %v948, %v956
      %v959 = vmax.f32 %v957, %v937
      %v960 = vmax.f32 %v958, %v938
      %961 = vrot.lane.b32.xlu0 %v959, 1
      %v962 = vpop.permute.xlu0 %961
      %963 = vrot.lane.b32.xlu0 %v960, 1
      %v964 = vpop.permute.xlu0 %963
      %v965 = vsel %vm380, %v962, %v964
      %v966 = vsel %vm380, %v964, %v962
      %v967 = vmul.f32 %v966, %v293
      %v968 = vmul.f32 %v965, %v294
      %969 = vrot.lane.b32.xlu0 %v959, 127
      %v970 = vpop.permute.xlu0 %969
      %971 = vrot.lane.b32.xlu0 %v960, 127
      %v972 = vpop.permute.xlu0 %971
      %v973 = vsel %vm363, %v970, %v972
      %v974 = vsel %vm363, %v972, %v970
      %v975 = vmul.f32 %v973, %v299
      %v976 = vmul.f32 %v974, %v300
      %v977 = vmax.f32 %v967, %v975
      %v978 = vmax.f32 %v968, %v976
      %v979 = vmax.f32 %v977, %v959
      %v980 = vmax.f32 %v978, %v960
      %v983 = vrot.slane %v931, 3
      %v984 = vrot.slane %v932, 3
      %987 = vrot.lane.b32.xlu0 %v983, 16
      %v988 = vpop.permute.xlu0 %987
      %989 = vrot.lane.b32.xlu0 %v984, 16
      %v990 = vpop.permute.xlu0 %989
      %v991 = vsel %vm313, %v988, %v990
      %v992 = vsel %vm313, %v990, %v988
      %v993 = vmul.f32 %v992, %v281
      %v994 = vmul.f32 %v991, %v282
      %995 = vrot.lane.b32.xlu0 %v983, 112
      %v996 = vpop.permute.xlu0 %995
      %997 = vrot.lane.b32.xlu0 %v984, 112
      %v998 = vpop.permute.xlu0 %997
      %v999 = vsel %vm330, %v996, %v998
      %v1000 = vsel %vm330, %v998, %v996
      %v1001 = vmul.f32 %v999, %v287
      %v1002 = vmul.f32 %v1000, %v288
      %v1003 = vmax.f32 %v993, %v1001
      %v1004 = vmax.f32 %v994, %v1002
      %v1005 = vmax.f32 %v1003, %v983
      %v1006 = vmax.f32 %v1004, %v984
      %1007 = vrot.lane.b32.xlu0 %v1005, 1
      %v1008 = vpop.permute.xlu0 %1007
      %1009 = vrot.lane.b32.xlu0 %v1006, 1
      %v1010 = vpop.permute.xlu0 %1009
      %v1011 = vsel %vm380, %v1008, %v1010
      %v1012 = vsel %vm380, %v1010, %v1008
      %v1013 = vmul.f32 %v1012, %v293
      %v1014 = vmul.f32 %v1011, %v294
      %1015 = vrot.lane.b32.xlu0 %v1005, 127
      %v1016 = vpop.permute.xlu0 %1015
      %1017 = vrot.lane.b32.xlu0 %v1006, 127
      %v1018 = vpop.permute.xlu0 %1017
      %v1019 = vsel %vm363, %v1016, %v1018
      %v1020 = vsel %vm363, %v1018, %v1016
      %v1021 = vmul.f32 %v1019, %v299
      %v1022 = vmul.f32 %v1020, %v300
      %v1023 = vmax.f32 %v1013, %v1021
      %v1024 = vmax.f32 %v1014, %v1022
      %v1025 = vmax.f32 %v1023, %v1005
      %v1026 = vmax.f32 %v1024, %v1006
      %vm1027 = vcmp.gt.f32.partialorder %v979, 0.1
      %vm1028 = vcmp.gt.f32.partialorder %v980, 0.1
      %vm1029 = vcmp.gt.f32.partialorder %v1025, 0.1
      %vm1030 = vcmp.gt.f32.partialorder %v1026, 0.1
      %vm1031 = vmand %vm1027, %vm1029
      %vm1032 = vmand %vm1028, %vm1030
      %v1033 = vsel %vm1031, 1, 0
      %v1034 = vsel %vm1032, 1, 0
      %v1035 = vcvt.s32.f32 %v1033
      %v1036 = vcvt.s32.f32 %v1034
      %v1037 = vlaneseq
      %v1038 = vshrl.u32 %v1037, 7
      %v1039 = vsub.s32 0, %v1038
      %v1040 = vrot.slane %v1035, %v1039
      %v1041 = vlaneseq
      %v1042 = vshrl.u32 %v1041, 7
      %v1043 = vsub.s32 0, %v1042
      %v1044 = vrot.slane %v1036, %v1043
      %v1045 = vmul.f32 %v931, %v1040
      %v1046 = vmul.f32 %v932, %v1044
      %v1047 = vmul.f32 %v933, %v1040
      %v1048 = vmul.f32 %v934, %v1044
      %1049 = vst [vmem:[%s248] sm:$0xff] %v1045
      %1050 = vst [vmem:[%s248 + $0x8] sm:$0xff] %v1046
      %1051 = vst [vmem:[%s248 + $0x10] sm:$0xff] %v1047
      %1052 = vst [vmem:[%s248 + $0x18] sm:$0xff] %v1048
      %s1053 = smul.u32 2, %s16
      %p1054 = scmp.lt.s32.totalorder %s1053, 3
      %s1055 = scalar_select %p1054, %s1053, 3
      %s1056 = smul.addr %s1055, 2
      %s1057 = smul.addr %s1056, 8
      %s1058 = scalar_lea.vmem %s5, %s1057
      // Predicated region
      $region41: #{cann_forward.1} parent=39 // pred_check
        %p1059 = pneg %p149
      $region42: #{cann_forward.1} parent=39 // pred_check_branch
        %1061 = sbr.rel (%p1059) target = $region44
      $region43: #{cann_forward.1} parent=39 // pred_region
        %s1062 = smul.u32 2, %s16
      $region44: #{cann_forward.1} parent=39 // pred_fallthru
        _
    $region40: #{cann_forward.1} parent=5 // pred_fallthru
      _
    %p1063 = scmp.le.s32.totalorder 2, %s11
    // Predicated region
    $region45: #{cann_forward.1} parent=5 // pred_check
      %p1064 = pneg %p1063
    $region46: #{cann_forward.1} parent=5 // pred_check_branch
      %1066 = sbr.rel (%p1064) target = $region48
    $region47: #{cann_forward.1} parent=5 // pred_region
      %s1067 = ssub.s32 %s11, 2
      // Predicated region
      $region49: #{cann_forward.1} parent=47 // pred_check
        %p1068 = pneg %p155
      $region50: #{cann_forward.1} parent=47 // pred_check_branch
        %1070 = sbr.rel (%p1068) target = $region52
      $region51: #{cann_forward.1} parent=47 // pred_region
        %s1071 = smul.u32 2, %s17
        %p1072 = scmp.lt.s32.totalorder %s1071, 3
        %s1073 = scalar_select %p1072, %s1071, 3
        %s1074 = smul.addr %s1073, 2
        %s1075 = smul.addr %s1074, 8
        %s1076 = scalar_lea.vmem %s5, %s1075
      $region52: #{cann_forward.1} parent=47 // pred_fallthru
        _
    $region48: #{cann_forward.1} parent=5 // pred_fallthru
      _
  $region6: #{cann_forward.1} parent=0 // loop_footer
    %s15 = sadd.s32 1, %s11
  $region7: #{cann_forward.1} parent=0 // loop_footer_branch
    %10 = sbr.rel target = $region3
  $region8: #{cann_forward.1} parent=0 // loop_exit
    _

</llo_original>
